<compile_context>
chip_gen: v7x
topology: tpu7x:2x2x1
jax: 0.10.0
libtpu: 0.0.40
codegen_flags: <defaults>
</compile_context>

<pallas_src>
import math

import jax
import jax.numpy as jnp
from jax.experimental import pallas as pl
from jax.experimental.pallas import tpu as pltpu


# ----- module definition (mirrors get_bond_feature_dims) ---------------------
E_MAP_DEFAULT = {
    "bond_type": ["misc", "SINGLE", "DOUBLE", "TRIPLE", "AROMATIC"],
    "stereo": ["STEREONONE", "STEREOZ", "STEREOE", "STEREOCIS", "STEREOTRANS",
               "STEREOANY"],
    "is_conjugated": [False, True],
}


def get_bond_feature_dims():
    return [len(v) + 10 for v in (E_MAP_DEFAULT["bond_type"],
                                  E_MAP_DEFAULT["stereo"],
                                  E_MAP_DEFAULT["is_conjugated"])]


NUM_FEATURES = 3
FEATURE_DIMS = get_bond_feature_dims()          # [15, 16, 12]
V_PAD = 16                                      # per-feature slab height
K_PAD = 128                                     # stacked table rows, padded for clean MXU K


def _round_up(x, m):
    return ((x + m - 1) // m) * m


# ----- Pallas kernel ----------------------------------------------------------
def bond_encoder_kernel(idx_ref, tab_ref, out_ref):
    """Fused one-hot @ stacked-table matmul for one edge tile.

    idx_ref: (TE, 3) int32 raw feature indices.
    tab_ref: (K_PAD, D) float32 stacked tables (feature f occupies rows
             [f*V_PAD, f*V_PAD + FEATURE_DIMS[f])); remaining rows are zero.
    out_ref: (TE, D) output tile (f32 or bf16).
    """
    idx = idx_ref[...]                                          # (TE, 3)
    te = idx.shape[0]

    lane = jax.lax.broadcasted_iota(jnp.int32, (te, K_PAD), 1)
    hit = jnp.zeros((te, K_PAD), jnp.bool_)
    for f in range(NUM_FEATURES):                               # unrolled, 3 feats
        i_f = idx[:, f:f + 1]                                   # (TE, 1)
        valid = (i_f >= 0) & (i_f < FEATURE_DIMS[f])
        row = jnp.where(valid, i_f + f * V_PAD, -1)             # -1 -> all-zero row
        hit = hit | (lane == row)
    onehot = hit.astype(jnp.float32)                            # (TE, K_PAD)

    # Single MXU push, K=128; feature sum comes from the contraction, result
    # goes straight to the output tile (no accumulator, no zero-init).
    acc = jnp.dot(onehot, tab_ref[...], preferred_element_type=jnp.float32)
    out_ref[...] = acc.astype(out_ref.dtype)


# ----- wrapper ----------------------------------------------------------------
def bond_encoder(edge_attr, tables_flat, *, tile_e=None,
                 out_dtype=jnp.float32, return_padded=False):
    """edge_attr: (E, 3) int, tables_flat: (K_PAD, D) f32 -> (E, D) out_dtype.

    return_padded=True returns the (E_pad, D_pad) array (padded rows are exactly
    zero) so a downstream consumer can fuse the slice instead of paying an extra
    HBM copy.
    """
    E, F = edge_attr.shape
    assert F == NUM_FEATURES
    K_, D = tables_flat.shape
    assert K_ == K_PAD

    out_bytes = jnp.dtype(out_dtype).itemsize

    # Keep output stores lane-dense: pad D to a multiple of 128.
    D_pad = max(128, _round_up(D, 128))
    if D_pad != D:
        tables_flat = jnp.pad(tables_flat, ((0, 0), (0, D_pad - D)))

    # Corrected per-row VMEM footprint (bytes):
    #   index block  (tile_e, 3) i32 lane-pads to 128 lanes, double-buffered: 2*512
    #   one-hot LHS  (tile_e, K_PAD) f32, materialized once:                   512
    #   output tile  (tile_e, D_pad), double-buffered:                 2*D_pad*out_bytes
    per_row = 2 * 128 * 4 + K_PAD * 4 + 2 * D_pad * out_bytes
    table_bytes = 2 * K_PAD * D_pad * 4          # stacked table, double-buffered

    if tile_e is None:
        vmem_budget = 24 * 1024 * 1024           # safe under v7x 64 MiB physical
        cap = max(8, vmem_budget // per_row)
        tile_e = min(8192, cap)                  # amortize ~0.35 us/step overhead
        if E > 8:
            # Keep >= 2 grid steps so v7x's 2nd TensorCore gets work.
            tile_e = min(tile_e, _round_up(pl.cdiv(E, 2), 8))
        tile_e = max(8, (tile_e // 8) * 8)
    assert tile_e % 8 == 0, "tile_e must be a multiple of 8 (sublane alignment)"

    E_pad = _round_up(E, tile_e)

    idx = edge_attr.astype(jnp.int32)
    if E_pad != E:
        # Pad rows with -1: the in-kernel validity mask makes them exact zeros.
        idx = jnp.pad(idx, ((0, E_pad - E), (0, 0)), constant_values=-1)

    footprint = tile_e * per_row + table_bytes
    vmem_limit = int(min(48 * 1024 * 1024, max(footprint + (2 << 20), 16 << 20)))

    cost = pl.CostEstimate(
        flops=2 * E_pad * K_PAD * D_pad,
        transcendentals=0,
        bytes_accessed=E_pad * (NUM_FEATURES * 4 + D_pad * out_bytes)
        + K_PAD * D_pad * 4,
    )

    grid = (E_pad // tile_e,)
    out = pl.pallas_call(
        bond_encoder_kernel,
        out_shape=jax.ShapeDtypeStruct((E_pad, D_pad), out_dtype),
        grid_spec=pltpu.PrefetchScalarGridSpec(
            num_scalar_prefetch=0,
            grid=grid,
            in_specs=[
                pl.BlockSpec((tile_e, NUM_FEATURES), lambda i: (i, 0)),  # raw idx tile
                pl.BlockSpec((K_PAD, D_pad), lambda i: (0, 0)),          # stacked table
            ],
            out_specs=pl.BlockSpec((tile_e, D_pad), lambda i: (i, 0)),
        ),
        compiler_params=pltpu.CompilerParams(
            dimension_semantics=("parallel",),
            vmem_limit_bytes=vmem_limit),
        cost_estimate=cost,
    )(idx, tables_flat)

    if return_padded:
        return out                       # (E_pad, D_pad); padded rows are zero
    out = out[:E]                        # let XLA fuse this into the consumer
    if D_pad != D:
        out = out[:, :D]
    return out


# ----- deterministic parameter init (xavier_uniform, like the module) ---------
def init_tables(key, emb_dim):
    """Per-feature xavier_uniform tables stacked into a (K_PAD, emb_dim) slab."""
    tables = jnp.zeros((K_PAD, emb_dim), jnp.float32)
    keys = jax.random.split(key, NUM_FEATURES)
    for i, dim in enumerate(FEATURE_DIMS):
        bound = math.sqrt(6.0 / (dim + emb_dim))        # xavier_uniform
        w = jax.random.uniform(keys[i], (dim, emb_dim), jnp.float32,
                               minval=-bound, maxval=bound)
        tables = tables.at[i * V_PAD:i * V_PAD + dim, :].set(w)
    return tables


# ----- reference (pure JAX) ----------------------------------------------------
def bond_encoder_ref(edge_attr, tables_flat):
    out = 0.0
    for i in range(NUM_FEATURES):
        out = out + tables_flat[i * V_PAD + edge_attr[:, i]]
    return out


if __name__ == "__main__":
    key = jax.random.PRNGKey(0)
    k_tab, k_idx = jax.random.split(key)

    emb_dim = 128        # lane-dense output (multiple of 128)
    num_edges = 300      # not a tile multiple -> exercises padding + 2-step grid

    tables = init_tables(k_tab, emb_dim)

    # edge_attr: (E, 3) with column i drawn from [0, FEATURE_DIMS[i])
    idx_keys = jax.random.split(k_idx, NUM_FEATURES)
    cols = [jax.random.randint(idx_keys[i], (num_edges, 1), 0, FEATURE_DIMS[i],
                               dtype=jnp.int32)
            for i in range(NUM_FEATURES)]
    edge_attr = jnp.concatenate(cols, axis=1)           # (300, 3) int32

    ref = bond_encoder_ref(edge_attr, tables)

    # f32 path (default; auto tile selection keeps >= 2 grid steps).
    out = bond_encoder(edge_attr, tables)
    out = jax.block_until_ready(out)
    assert out.shape == (num_edges, emb_dim)
    assert jnp.allclose(out, ref, atol=1e-5, rtol=1e-5), "f32 mismatch vs reference"

    # bf16 output path (halves the dominant HBM write stream).
    out_bf16 = bond_encoder(edge_attr, tables, out_dtype=jnp.bfloat16)
    out_bf16 = jax.block_until_ready(out_bf16)
    assert out_bf16.shape == (num_edges, emb_dim)
    assert out_bf16.dtype == jnp.bfloat16
    assert jnp.allclose(out_bf16.astype(jnp.float32), ref, atol=2e-2), \
        "bf16 mismatch vs reference"

    print("KERNEL_OK")
</pallas_src>

<mosaic_0001>
module attributes {stable_mosaic.version = 11 : i64} {
  func.func @bond_encoder_kernel(%arg0: i32, %arg1: memref<152x3xi32, #tpu.memory_space<vmem>>, %arg2: memref<128x128xf32, #tpu.memory_space<vmem>>, %arg3: memref<152x128xf32, #tpu.memory_space<vmem>>) attributes {dimension_semantics = [#tpu.dimension_semantics<parallel>], iteration_bounds = array<i64: 2>, scalar_prefetch = 0 : i64, scratch_operands = 0 : i64, tpu.core_type = #tpu.core_type<tc>, window_params = [{transform_indices = @transform_0, window_bounds = array<i64: 152, 3>}, {pipeline_mode = #tpu.pipeline_mode<synchronous>, transform_indices = @transform_1, window_bounds = array<i64: 128, 128>}, {transform_indices = @transform_2, window_bounds = array<i64: 152, 128>}]} {
    %c0 = arith.constant 0 : index
    %c0_0 = arith.constant 0 : index
    %0 = vector.load %arg1[%c0, %c0_0] : memref<152x3xi32, #tpu.memory_space<vmem>>, vector<152x3xi32>
    %1 = tpu.iota {dimensions = array<i32: 1>} : vector<152x128xi32>
    %false = arith.constant false
    %2 = vector.broadcast %false : i1 to vector<152x128xi1>
    %3 = vector.extract_strided_slice %0 {offsets = [0, 0], sizes = [152, 1], strides = [1, 1]} : vector<152x3xi32> to vector<152x1xi32>
    %c0_i32 = arith.constant 0 : i32
    %4 = vector.broadcast %c0_i32 : i32 to vector<152x1xi32>
    %5 = arith.cmpi sge, %3, %4 : vector<152x1xi32>
    %c15_i32 = arith.constant 15 : i32
    %6 = vector.broadcast %c15_i32 : i32 to vector<152x1xi32>
    %7 = arith.cmpi slt, %3, %6 : vector<152x1xi32>
    %8 = arith.andi %5, %7 : vector<152x1xi1>
    %c0_i32_1 = arith.constant 0 : i32
    %9 = vector.broadcast %c0_i32_1 : i32 to vector<152x1xi32>
    %10 = arith.addi %3, %9 : vector<152x1xi32>
    %c-1_i32 = arith.constant -1 : i32
    %11 = vector.broadcast %c-1_i32 : i32 to vector<152x1xi32>
    %12 = arith.select %8, %10, %11 : vector<152x1xi1>, vector<152x1xi32>
    %13 = vector.broadcast %12 : vector<152x1xi32> to vector<152x128xi32>
    %14 = arith.cmpi eq, %1, %13 : vector<152x128xi32>
    %15 = arith.ori %2, %14 : vector<152x128xi1>
    %16 = vector.extract_strided_slice %0 {offsets = [0, 1], sizes = [152, 1], strides = [1, 1]} : vector<152x3xi32> to vector<152x1xi32>
    %c0_i32_2 = arith.constant 0 : i32
    %17 = vector.broadcast %c0_i32_2 : i32 to vector<152x1xi32>
    %18 = arith.cmpi sge, %16, %17 : vector<152x1xi32>
    %c16_i32 = arith.constant 16 : i32
    %19 = vector.broadcast %c16_i32 : i32 to vector<152x1xi32>
    %20 = arith.cmpi slt, %16, %19 : vector<152x1xi32>
    %21 = arith.andi %18, %20 : vector<152x1xi1>
    %c16_i32_3 = arith.constant 16 : i32
    %22 = vector.broadcast %c16_i32_3 : i32 to vector<152x1xi32>
    %23 = arith.addi %16, %22 : vector<152x1xi32>
    %c-1_i32_4 = arith.constant -1 : i32
    %24 = vector.broadcast %c-1_i32_4 : i32 to vector<152x1xi32>
    %25 = arith.select %21, %23, %24 : vector<152x1xi1>, vector<152x1xi32>
    %26 = vector.broadcast %25 : vector<152x1xi32> to vector<152x128xi32>
    %27 = arith.cmpi eq, %1, %26 : vector<152x128xi32>
    %28 = arith.ori %15, %27 : vector<152x128xi1>
    %29 = vector.extract_strided_slice %0 {offsets = [0, 2], sizes = [152, 1], strides = [1, 1]} : vector<152x3xi32> to vector<152x1xi32>
    %c0_i32_5 = arith.constant 0 : i32
    %30 = vector.broadcast %c0_i32_5 : i32 to vector<152x1xi32>
    %31 = arith.cmpi sge, %29, %30 : vector<152x1xi32>
    %c12_i32 = arith.constant 12 : i32
    %32 = vector.broadcast %c12_i32 : i32 to vector<152x1xi32>
    %33 = arith.cmpi slt, %29, %32 : vector<152x1xi32>
    %34 = arith.andi %31, %33 : vector<152x1xi1>
    %c32_i32 = arith.constant 32 : i32
    %35 = vector.broadcast %c32_i32 : i32 to vector<152x1xi32>
    %36 = arith.addi %29, %35 : vector<152x1xi32>
    %c-1_i32_6 = arith.constant -1 : i32
    %37 = vector.broadcast %c-1_i32_6 : i32 to vector<152x1xi32>
    %38 = arith.select %34, %36, %37 : vector<152x1xi1>, vector<152x1xi32>
    %39 = vector.broadcast %38 : vector<152x1xi32> to vector<152x128xi32>
    %40 = arith.cmpi eq, %1, %39 : vector<152x128xi32>
    %41 = arith.ori %28, %40 : vector<152x128xi1>
    %42 = arith.extui %41 : vector<152x128xi1> to vector<152x128xi32>
    %43 = arith.sitofp %42 : vector<152x128xi32> to vector<152x128xf32>
    %c0_7 = arith.constant 0 : index
    %c0_8 = arith.constant 0 : index
    %44 = vector.load %arg2[%c0_7, %c0_8] : memref<128x128xf32, #tpu.memory_space<vmem>>, vector<128x128xf32>
    %cst = arith.constant dense<0.000000e+00> : vector<152x128xf32>
    %45 = tpu.matmul %43, %44, %cst {dimension_numbers = #tpu.dot_dimension_numbers<[1], [0], [0], [1], [0, 0, 1, 1], [], []>} : vector<152x128xf32>, vector<128x128xf32>, vector<152x128xf32> -> vector<152x128xf32>
    %c0_9 = arith.constant 0 : index
    %c0_10 = arith.constant 0 : index
    %46 = vector.load %arg3[%c0_9, %c0_10] : memref<152x128xf32, #tpu.memory_space<vmem>>, vector<152x128xf32>
    tpu.vector_store %arg3[%c0_9, %c0_10], %45 {strides = array<i32>} : memref<152x128xf32, #tpu.memory_space<vmem>>, vector<152x128xf32>,
    return
  }
  func.func @transform_0(%arg0: i32) -> (i32, i32) {
    %c0_i32 = arith.constant 0 : i32
    %c0_i32_0 = arith.constant 0 : i32
    return %arg0, %c0_i32 : i32, i32
  }
  func.func @transform_1(%arg0: i32) -> (i32, i32) {
    %c0_i32 = arith.constant 0 : i32
    %c0_i32_0 = arith.constant 0 : i32
    %c0_i32_1 = arith.constant 0 : i32
    return %c0_i32, %c0_i32_0 : i32, i32
  }
  func.func @transform_2(%arg0: i32) -> (i32, i32) {
    %c0_i32 = arith.constant 0 : i32
    %c0_i32_0 = arith.constant 0 : i32
    return %arg0, %c0_i32 : i32, i32
  }
}

</mosaic_0001>

<llo_original>
// kernel: tpu_custom_call.1
$region0: #{tpu_custom_call.1}
  #allocation0 [shape = 'u32[]', space=smem, size = 0x4, offset = 0x4, fixed_abs, tag = 'smem constant byte address 0x4 - core index']
  #allocation1 [shape = 'u32[144,128]{1,0:T(1,128)}', space=vmem, size = 0x12000, scoped, tag = 'internal scratch']
  %s0 = inlined_call_operand.vmem [shape: s32[304,3], index: 0, kind: input, shape index: {}]
  %s1 = inlined_call_operand.vmem [shape: f32[128,128], index: 1, kind: input, shape index: {}]
  %s2 = inlined_call_operand.hbm [shape: f32[304,128], index: 2, kind: output, shape index: {}]
  %s3 = sld [smem:[#allocation0]]
  $region41: #{tpu_custom_call.1} parent=0
    _
  %s5 = ssub.s32 1, %s3
  %s6 = scalar_select 0, %s5, %s3
  $region1: #{tpu_custom_call.1} parent=0
    #allocation2 [shape = 'u8[155648]{0}', space=vmem, size = 0x26000, scoped, tag = 'output window, operand 0']
    #allocation3 [shape = 's32[2]{0}', space=sflag, size = 0x8, scoped, tag = 'scoped memory for tpu_custom_call.1']
    %7 = vsyncpa [#allocation3], 0
    %s8 = scalar_lea.sflag [#allocation3], 1
    %9 = vsyncpa %s8, 0
    loop: start=0, step=1, limit=4
    $region2: #{tpu_custom_call.1} parent=1 // loop_pre_header
      _
    $region3: #{tpu_custom_call.1} parent=1 // loop_header
      %s11 = sphi 0, %s15
      %p12 = scmp.ge.s32.totalorder %s11, 4
      %s21 = sphi 0, %s23
      %s24 = sphi 0, %s21
      %s25 = sphi 0, %s24
      %s41 = sphi 0, %s25
      %s45 = sphi 0, %s45
      %s47 = sphi 0, %s45
      %s48 = sphi 0, %s47
      %s62 = sphi 0, %s48
      %s68 = sphi 0, %s70
      %s71 = sphi 0, %s68
      %s72 = sphi 0, %s71
      %s88 = sphi 0, %s72
    $region4: #{tpu_custom_call.1} parent=1 // loop_header_branch
      %14 = sbr.rel (%p12) target = $region8
    $region5: #{tpu_custom_call.1} parent=1 // loop_body
      %s16 = ssub.s32 %s11, 1
      %s17 = ssub.s32 %s11, 2
      %s18 = sadd.s32 %s11, 1
      %s19 = ssub.s32 %s11, %s18
      %p20 = scmp.eq.s32.totalorder %s19, 0
      %s22 = sadd.s32 %s21, 1
      %s23 = scalar_select %p20, %s21, %s22
      %p26 = pneg %p20
      %p27 = scmp.eq.s32.totalorder %s11, 1
      %p28 = por %p26, %p27
      %p29 = scmp.ne.s32.totalorder %s21, %s24
      %p30 = scmp.eq.s32.totalorder %s11, 0
      %p31 = por %p29, %p30
      %p32 = scmp.ne.s32.totalorder %s21, %s24
      %p33 = scmp.eq.s32.totalorder %s16, 1
      %p34 = por %p32, %p33
      %p35 = scmp.ne.s32.totalorder %s24, %s25
      %p36 = scmp.eq.s32.totalorder %s16, 0
      %p37 = por %p35, %p36
      %p38 = scmp.ne.s32.totalorder %s24, %s25
      %p39 = scmp.eq.s32.totalorder %s17, 1
      %p40 = por %p38, %p39
      %p42 = scmp.ne.s32.totalorder %s25, %s41
      %p43 = scmp.eq.s32.totalorder %s17, 0
      %p44 = por %p42, %p43
      %s46 = sadd.s32 %s45, 1
      %p49 = scmp.eq.s32.totalorder %s11, 1
      %p50 = scmp.ne.s32.totalorder %s45, %s47
      %p51 = scmp.eq.s32.totalorder %s11, 0
      %p52 = por %p50, %p51
      %p53 = scmp.ne.s32.totalorder %s45, %s47
      %p54 = scmp.eq.s32.totalorder %s16, 1
      %p55 = por %p53, %p54
      %p56 = scmp.ne.s32.totalorder %s47, %s48
      %p57 = scmp.eq.s32.totalorder %s16, 0
      %p58 = por %p56, %p57
      %p59 = scmp.ne.s32.totalorder %s47, %s48
      %p60 = scmp.eq.s32.totalorder %s17, 1
      %p61 = por %p59, %p60
      %p63 = scmp.ne.s32.totalorder %s48, %s62
      %p64 = scmp.eq.s32.totalorder %s17, 0
      %p65 = por %p63, %p64
      %s66 = ssub.s32 %s11, %s18
      %p67 = scmp.eq.s32.totalorder %s66, 0
      %s69 = sadd.s32 %s68, 1
      %s70 = scalar_select %p67, %s68, %s69
      %p73 = pneg %p67
      %p74 = scmp.eq.s32.totalorder %s11, 1
      %p75 = por %p73, %p74
      %p76 = scmp.ne.s32.totalorder %s68, %s71
      %p77 = scmp.eq.s32.totalorder %s11, 0
      %p78 = por %p76, %p77
      %p79 = scmp.ne.s32.totalorder %s68, %s71
      %p80 = scmp.eq.s32.totalorder %s16, 1
      %p81 = por %p79, %p80
      %p82 = scmp.ne.s32.totalorder %s71, %s72
      %p83 = scmp.eq.s32.totalorder %s16, 0
      %p84 = por %p82, %p83
      %p85 = scmp.ne.s32.totalorder %s71, %s72
      %p86 = scmp.eq.s32.totalorder %s17, 1
      %p87 = por %p85, %p86
      %p89 = scmp.ne.s32.totalorder %s72, %s88
      %p90 = scmp.eq.s32.totalorder %s17, 0
      %p91 = por %p89, %p90
      %p92 = scmp.le.s32.totalorder 1, %s11
      %p93 = scmp.lt.s32.totalorder %s11, 3
      %p94 = pnand %p92, %p93
      %p95 = pneg %p94
      // Predicated region
      $region9: #{tpu_custom_call.1} parent=5 // pred_check
        _
      $region10: #{tpu_custom_call.1} parent=5 // pred_check_branch
        %97 = sbr.rel (%p94) target = $region12
      $region11: #{tpu_custom_call.1} parent=5 // pred_region
        %s98 = ssub.s32 %s11, 1
        // Predicated region
        $region13: #{tpu_custom_call.1} parent=11 // pred_check
          %p99 = pneg %p58
        $region14: #{tpu_custom_call.1} parent=11 // pred_check_branch
          %101 = sbr.rel (%p99) target = $region16
        $region15: #{tpu_custom_call.1} parent=11 // pred_region
          _
        $region16: #{tpu_custom_call.1} parent=11 // pred_fallthru
          _
      $region12: #{tpu_custom_call.1} parent=5 // pred_fallthru
        _
      %p102 = scmp.lt.s32.totalorder %s11, 2
      // Predicated region
      $region17: #{tpu_custom_call.1} parent=5 // pred_check
        %p103 = pneg %p102
      $region18: #{tpu_custom_call.1} parent=5 // pred_check_branch
        %105 = sbr.rel (%p103) target = $region20
      $region19: #{tpu_custom_call.1} parent=5 // pred_region
        // Predicated region
        $region21: #{tpu_custom_call.1} parent=19 // pred_check
          %p106 = pneg %p31
        $region22: #{tpu_custom_call.1} parent=19 // pred_check_branch
          %108 = sbr.rel (%p106) target = $region24
        $region23: #{tpu_custom_call.1} parent=19 // pred_region
          %s109 = smul.u32 19, %s11
          %p110 = scmp.lt.s32.totalorder %s109, 37
          %s111 = scalar_select %p110, %s109, 37
          %s112 = smul.addr %s111, 8
          %s113 = scalar_lea.vmem %s0, %s112
          %s114 = smul.u32 19, %s11
        $region24: #{tpu_custom_call.1} parent=19 // pred_fallthru
          _
      $region20: #{tpu_custom_call.1} parent=5 // pred_fallthru
        _
      %p115 = scmp.le.s32.totalorder 1, %s11
      %p116 = scmp.lt.s32.totalorder %s11, 3
      %p117 = pnand %p115, %p116
      %p118 = pneg %p117
      // Predicated region
      $region25: #{tpu_custom_call.1} parent=5 // pred_check
        _
      $region26: #{tpu_custom_call.1} parent=5 // pred_check_branch
        %120 = sbr.rel (%p117) target = $region28
      $region27: #{tpu_custom_call.1} parent=5 // pred_region
        %s121 = ssub.s32 %s11, 1
        %s122 = smul.u32 19, %s16
        %p123 = scmp.lt.s32.totalorder %s122, 37
        %s124 = scalar_select %p123, %s122, 37
        %s125 = smul.addr %s124, 8
        %s126 = scalar_lea.vmem %s0, %s125
        %p127 = pneg %p37
        %p128 = pneg %p34
        %p129 = pneg %p58
        %p130 = pneg %p55
        %p131 = pneg %p84
        %p132 = pneg %p81
        %s133 = sand.u32 %s71, 1
        %s134 = scalar_lea.sflag [#allocation3], %s133
        %s135 = sand.u32 %s71, 1
        %s136 = smul.addr %s135, 152
        %s137 = scalar_lea.vmem [#allocation2], %s136
        %s138 = smul.u32 19, %s16
        %p139 = scmp.lt.s32.totalorder %s138, 37
        %s140 = scalar_select %p139, %s138, 37
        %s141 = smul.addr %s140, 8
        %s142 = scalar_lea.vmem %s0, %s141
        %s143 = smul.u32 19, %s16
        %s144 = smul.u32 19, %s16
        %v145 = vld [vmem:[%s142] sm:$0xff]
        %v146 = vld [vmem:[%s142 + $0x8] sm:$0xff]
        %v147 = vld [vmem:[%s142 + $0x10] sm:$0xff]
        %v148 = vld [vmem:[%s142 + $0x18] sm:$0xff]
        %v149 = vld [vmem:[%s142 + $0x20] sm:$0xff]
        %v150 = vld [vmem:[%s142 + $0x28] sm:$0xff]
        %v151 = vld [vmem:[%s142 + $0x30] sm:$0xff]
        %v152 = vld [vmem:[%s142 + $0x38] sm:$0xff]
        %v153 = vld [vmem:[%s142 + $0x40] sm:$0xff]
        %v154 = vld [vmem:[%s142 + $0x48] sm:$0xff]
        %v155 = vld [vmem:[%s142 + $0x50] sm:$0xff]
        %v156 = vld [vmem:[%s142 + $0x58] sm:$0xff]
        %v157 = vld [vmem:[%s142 + $0x60] sm:$0xff]
        %v158 = vld [vmem:[%s142 + $0x68] sm:$0xff]
        %v159 = vld [vmem:[%s142 + $0x70] sm:$0xff]
        %v160 = vld [vmem:[%s142 + $0x78] sm:$0xff]
        %v161 = vld [vmem:[%s142 + $0x80] sm:$0xff]
        %v162 = vld [vmem:[%s142 + $0x88] sm:$0xff]
        %v163 = vld [vmem:[%s142 + $0x90] sm:$0xff]
        %v164 = vlaneseq
        %v165 = vand.u32 %v164, 127
        %vm166 = vcmp.ge.s32.totalorder %v145, 0
        %vm167 = vcmp.ge.s32.totalorder %v146, 0
        %vm168 = vcmp.ge.s32.totalorder %v147, 0
        %vm169 = vcmp.ge.s32.totalorder %v148, 0
        %vm170 = vcmp.ge.s32.totalorder %v149, 0
        %vm171 = vcmp.ge.s32.totalorder %v150, 0
        %vm172 = vcmp.ge.s32.totalorder %v151, 0
        %vm173 = vcmp.ge.s32.totalorder %v152, 0
        %vm174 = vcmp.ge.s32.totalorder %v153, 0
        %vm175 = vcmp.ge.s32.totalorder %v154, 0
        %vm176 = vcmp.ge.s32.totalorder %v155, 0
        %vm177 = vcmp.ge.s32.totalorder %v156, 0
        %vm178 = vcmp.ge.s32.totalorder %v157, 0
        %vm179 = vcmp.ge.s32.totalorder %v158, 0
        %vm180 = vcmp.ge.s32.totalorder %v159, 0
        %vm181 = vcmp.ge.s32.totalorder %v160, 0
        %vm182 = vcmp.ge.s32.totalorder %v161, 0
        %vm183 = vcmp.ge.s32.totalorder %v162, 0
        %vm184 = vcmp.ge.s32.totalorder %v163, 0
        %vm185 = vcmp.lt.s32.totalorder %v145, 15
        %vm186 = vcmp.lt.s32.totalorder %v146, 15
        %vm187 = vcmp.lt.s32.totalorder %v147, 15
        %vm188 = vcmp.lt.s32.totalorder %v148, 15
        %vm189 = vcmp.lt.s32.totalorder %v149, 15
        %vm190 = vcmp.lt.s32.totalorder %v150, 15
        %vm191 = vcmp.lt.s32.totalorder %v151, 15
        %vm192 = vcmp.lt.s32.totalorder %v152, 15
        %vm193 = vcmp.lt.s32.totalorder %v153, 15
        %vm194 = vcmp.lt.s32.totalorder %v154, 15
        %vm195 = vcmp.lt.s32.totalorder %v155, 15
        %vm196 = vcmp.lt.s32.totalorder %v156, 15
        %vm197 = vcmp.lt.s32.totalorder %v157, 15
        %vm198 = vcmp.lt.s32.totalorder %v158, 15
        %vm199 = vcmp.lt.s32.totalorder %v159, 15
        %vm200 = vcmp.lt.s32.totalorder %v160, 15
        %vm201 = vcmp.lt.s32.totalorder %v161, 15
        %vm202 = vcmp.lt.s32.totalorder %v162, 15
        %vm203 = vcmp.lt.s32.totalorder %v163, 15
        %vm204 = vmand %vm166, %vm185
        %vm205 = vmand %vm167, %vm186
        %vm206 = vmand %vm168, %vm187
        %vm207 = vmand %vm169, %vm188
        %vm208 = vmand %vm170, %vm189
        %vm209 = vmand %vm171, %vm190
        %vm210 = vmand %vm172, %vm191
        %vm211 = vmand %vm173, %vm192
        %vm212 = vmand %vm174, %vm193
        %vm213 = vmand %vm175, %vm194
        %vm214 = vmand %vm176, %vm195
        %vm215 = vmand %vm177, %vm196
        %vm216 = vmand %vm178, %vm197
        %vm217 = vmand %vm179, %vm198
        %vm218 = vmand %vm180, %vm199
        %vm219 = vmand %vm181, %vm200
        %vm220 = vmand %vm182, %vm201
        %vm221 = vmand %vm183, %vm202
        %vm222 = vmand %vm184, %vm203
        %v223 = vsel %vm204, %v145, 4294967295
        %v224 = vsel %vm205, %v146, 4294967295
        %v225 = vsel %vm206, %v147, 4294967295
        %v226 = vsel %vm207, %v148, 4294967295
        %v227 = vsel %vm208, %v149, 4294967295
        %v228 = vsel %vm209, %v150, 4294967295
        %v229 = vsel %vm210, %v151, 4294967295
        %v230 = vsel %vm211, %v152, 4294967295
        %v231 = vsel %vm212, %v153, 4294967295
        %v232 = vsel %vm213, %v154, 4294967295
        %v233 = vsel %vm214, %v155, 4294967295
        %v234 = vsel %vm215, %v156, 4294967295
        %v235 = vsel %vm216, %v157, 4294967295
        %v236 = vsel %vm217, %v158, 4294967295
        %v237 = vsel %vm218, %v159, 4294967295
        %v238 = vsel %vm219, %v160, 4294967295
        %v239 = vsel %vm220, %v161, 4294967295
        %v240 = vsel %vm221, %v162, 4294967295
        %v241 = vsel %vm222, %v163, 4294967295
        %242 = vset.pattern.permute.xlu0 0
        %243 = vperm.xlu0 %242, %v223
        %v244 = vpop.permute.xlu0 %243
        %245 = vset.pattern.permute.xlu0 0
        %246 = vperm.xlu0 %245, %v224
        %v247 = vpop.permute.xlu0 %246
        %248 = vset.pattern.permute.xlu0 0
        %249 = vperm.xlu0 %248, %v225
        %v250 = vpop.permute.xlu0 %249
        %251 = vset.pattern.permute.xlu0 0
        %252 = vperm.xlu0 %251, %v226
        %v253 = vpop.permute.xlu0 %252
        %254 = vset.pattern.permute.xlu0 0
        %255 = vperm.xlu0 %254, %v227
        %v256 = vpop.permute.xlu0 %255
        %257 = vset.pattern.permute.xlu0 0
        %258 = vperm.xlu0 %257, %v228
        %v259 = vpop.permute.xlu0 %258
        %260 = vset.pattern.permute.xlu0 0
        %261 = vperm.xlu0 %260, %v229
        %v262 = vpop.permute.xlu0 %261
        %263 = vset.pattern.permute.xlu0 0
        %264 = vperm.xlu0 %263, %v230
        %v265 = vpop.permute.xlu0 %264
        %266 = vset.pattern.permute.xlu0 0
        %267 = vperm.xlu0 %266, %v231
        %v268 = vpop.permute.xlu0 %267
        %269 = vset.pattern.permute.xlu0 0
        %270 = vperm.xlu0 %269, %v232
        %v271 = vpop.permute.xlu0 %270
        %272 = vset.pattern.permute.xlu0 0
        %273 = vperm.xlu0 %272, %v233
        %v274 = vpop.permute.xlu0 %273
        %275 = vset.pattern.permute.xlu0 0
        %276 = vperm.xlu0 %275, %v234
        %v277 = vpop.permute.xlu0 %276
        %278 = vset.pattern.permute.xlu0 0
        %279 = vperm.xlu0 %278, %v235
        %v280 = vpop.permute.xlu0 %279
        %281 = vset.pattern.permute.xlu0 0
        %282 = vperm.xlu0 %281, %v236
        %v283 = vpop.permute.xlu0 %282
        %284 = vset.pattern.permute.xlu0 0
        %285 = vperm.xlu0 %284, %v237
        %v286 = vpop.permute.xlu0 %285
        %287 = vset.pattern.permute.xlu0 0
        %288 = vperm.xlu0 %287, %v238
        %v289 = vpop.permute.xlu0 %288
        %290 = vset.pattern.permute.xlu0 0
        %291 = vperm.xlu0 %290, %v239
        %v292 = vpop.permute.xlu0 %291
        %293 = vset.pattern.permute.xlu0 0
        %294 = vperm.xlu0 %293, %v240
        %v295 = vpop.permute.xlu0 %294
        %296 = vset.pattern.permute.xlu0 0
        %297 = vperm.xlu0 %296, %v241
        %v298 = vpop.permute.xlu0 %297
        %vm299 = vcmp.eq.s32.totalorder %v165, %v244
        %vm300 = vcmp.eq.s32.totalorder %v165, %v247
        %vm301 = vcmp.eq.s32.totalorder %v165, %v250
        %vm302 = vcmp.eq.s32.totalorder %v165, %v253
        %vm303 = vcmp.eq.s32.totalorder %v165, %v256
        %vm304 = vcmp.eq.s32.totalorder %v165, %v259
        %vm305 = vcmp.eq.s32.totalorder %v165, %v262
        %vm306 = vcmp.eq.s32.totalorder %v165, %v265
        %vm307 = vcmp.eq.s32.totalorder %v165, %v268
        %vm308 = vcmp.eq.s32.totalorder %v165, %v271
        %vm309 = vcmp.eq.s32.totalorder %v165, %v274
        %vm310 = vcmp.eq.s32.totalorder %v165, %v277
        %vm311 = vcmp.eq.s32.totalorder %v165, %v280
        %vm312 = vcmp.eq.s32.totalorder %v165, %v283
        %vm313 = vcmp.eq.s32.totalorder %v165, %v286
        %vm314 = vcmp.eq.s32.totalorder %v165, %v289
        %vm315 = vcmp.eq.s32.totalorder %v165, %v292
        %vm316 = vcmp.eq.s32.totalorder %v165, %v295
        %vm317 = vcmp.eq.s32.totalorder %v165, %v298
        %vm318 = vcmp.lt.s32.totalorder %v145, 16
        %vm319 = vcmp.lt.s32.totalorder %v146, 16
        %vm320 = vcmp.lt.s32.totalorder %v147, 16
        %vm321 = vcmp.lt.s32.totalorder %v148, 16
        %vm322 = vcmp.lt.s32.totalorder %v149, 16
        %vm323 = vcmp.lt.s32.totalorder %v150, 16
        %vm324 = vcmp.lt.s32.totalorder %v151, 16
        %vm325 = vcmp.lt.s32.totalorder %v152, 16
        %vm326 = vcmp.lt.s32.totalorder %v153, 16
        %vm327 = vcmp.lt.s32.totalorder %v154, 16
        %vm328 = vcmp.lt.s32.totalorder %v155, 16
        %vm329 = vcmp.lt.s32.totalorder %v156, 16
        %vm330 = vcmp.lt.s32.totalorder %v157, 16
        %vm331 = vcmp.lt.s32.totalorder %v158, 16
        %vm332 = vcmp.lt.s32.totalorder %v159, 16
        %vm333 = vcmp.lt.s32.totalorder %v160, 16
        %vm334 = vcmp.lt.s32.totalorder %v161, 16
        %vm335 = vcmp.lt.s32.totalorder %v162, 16
        %vm336 = vcmp.lt.s32.totalorder %v163, 16
        %vm337 = vmand %vm166, %vm318
        %vm338 = vmand %vm167, %vm319
        %vm339 = vmand %vm168, %vm320
        %vm340 = vmand %vm169, %vm321
        %vm341 = vmand %vm170, %vm322
        %vm342 = vmand %vm171, %vm323
        %vm343 = vmand %vm172, %vm324
        %vm344 = vmand %vm173, %vm325
        %vm345 = vmand %vm174, %vm326
        %vm346 = vmand %vm175, %vm327
        %vm347 = vmand %vm176, %vm328
        %vm348 = vmand %vm177, %vm329
        %vm349 = vmand %vm178, %vm330
        %vm350 = vmand %vm179, %vm331
        %vm351 = vmand %vm180, %vm332
        %vm352 = vmand %vm181, %vm333
        %vm353 = vmand %vm182, %vm334
        %vm354 = vmand %vm183, %vm335
        %vm355 = vmand %vm184, %vm336
        %v356 = vadd.s32 %v145, 16
        %v357 = vadd.s32 %v146, 16
        %v358 = vadd.s32 %v147, 16
        %v359 = vadd.s32 %v148, 16
        %v360 = vadd.s32 %v149, 16
        %v361 = vadd.s32 %v150, 16
        %v362 = vadd.s32 %v151, 16
        %v363 = vadd.s32 %v152, 16
        %v364 = vadd.s32 %v153, 16
        %v365 = vadd.s32 %v154, 16
        %v366 = vadd.s32 %v155, 16
        %v367 = vadd.s32 %v156, 16
        %v368 = vadd.s32 %v157, 16
        %v369 = vadd.s32 %v158, 16
        %v370 = vadd.s32 %v159, 16
        %v371 = vadd.s32 %v160, 16
        %v372 = vadd.s32 %v161, 16
        %v373 = vadd.s32 %v162, 16
        %v374 = vadd.s32 %v163, 16
        %v375 = vsel %vm337, %v356, 4294967295
        %v376 = vsel %vm338, %v357, 4294967295
        %v377 = vsel %vm339, %v358, 4294967295
        %v378 = vsel %vm340, %v359, 4294967295
        %v379 = vsel %vm341, %v360, 4294967295
        %v380 = vsel %vm342, %v361, 4294967295
        %v381 = vsel %vm343, %v362, 4294967295
        %v382 = vsel %vm344, %v363, 4294967295
        %v383 = vsel %vm345, %v364, 4294967295
        %v384 = vsel %vm346, %v365, 4294967295
        %v385 = vsel %vm347, %v366, 4294967295
        %v386 = vsel %vm348, %v367, 4294967295
        %v387 = vsel %vm349, %v368, 4294967295
        %v388 = vsel %vm350, %v369, 4294967295
        %v389 = vsel %vm351, %v370, 4294967295
        %v390 = vsel %vm352, %v371, 4294967295
        %v391 = vsel %vm353, %v372, 4294967295
        %v392 = vsel %vm354, %v373, 4294967295
        %v393 = vsel %vm355, %v374, 4294967295
        %394 = vset.pattern.permute.xlu0 1
        %395 = vperm.xlu0 %394, %v375
        %v396 = vpop.permute.xlu0 %395
        %397 = vset.pattern.permute.xlu0 1
        %398 = vperm.xlu0 %397, %v376
        %v399 = vpop.permute.xlu0 %398
        %400 = vset.pattern.permute.xlu0 1
        %401 = vperm.xlu0 %400, %v377
        %v402 = vpop.permute.xlu0 %401
        %403 = vset.pattern.permute.xlu0 1
        %404 = vperm.xlu0 %403, %v378
        %v405 = vpop.permute.xlu0 %404
        %406 = vset.pattern.permute.xlu0 1
        %407 = vperm.xlu0 %406, %v379
        %v408 = vpop.permute.xlu0 %407
        %409 = vset.pattern.permute.xlu0 1
        %410 = vperm.xlu0 %409, %v380
        %v411 = vpop.permute.xlu0 %410
        %412 = vset.pattern.permute.xlu0 1
        %413 = vperm.xlu0 %412, %v381
        %v414 = vpop.permute.xlu0 %413
        %415 = vset.pattern.permute.xlu0 1
        %416 = vperm.xlu0 %415, %v382
        %v417 = vpop.permute.xlu0 %416
        %418 = vset.pattern.permute.xlu0 1
        %419 = vperm.xlu0 %418, %v383
        %v420 = vpop.permute.xlu0 %419
        %421 = vset.pattern.permute.xlu0 1
        %422 = vperm.xlu0 %421, %v384
        %v423 = vpop.permute.xlu0 %422
        %424 = vset.pattern.permute.xlu0 1
        %425 = vperm.xlu0 %424, %v385
        %v426 = vpop.permute.xlu0 %425
        %427 = vset.pattern.permute.xlu0 1
        %428 = vperm.xlu0 %427, %v386
        %v429 = vpop.permute.xlu0 %428
        %430 = vset.pattern.permute.xlu0 1
        %431 = vperm.xlu0 %430, %v387
        %v432 = vpop.permute.xlu0 %431
        %433 = vset.pattern.permute.xlu0 1
        %434 = vperm.xlu0 %433, %v388
        %v435 = vpop.permute.xlu0 %434
        %436 = vset.pattern.permute.xlu0 1
        %437 = vperm.xlu0 %436, %v389
        %v438 = vpop.permute.xlu0 %437
        %439 = vset.pattern.permute.xlu0 1
        %440 = vperm.xlu0 %439, %v390
        %v441 = vpop.permute.xlu0 %440
        %442 = vset.pattern.permute.xlu0 1
        %443 = vperm.xlu0 %442, %v391
        %v444 = vpop.permute.xlu0 %443
        %445 = vset.pattern.permute.xlu0 1
        %446 = vperm.xlu0 %445, %v392
        %v447 = vpop.permute.xlu0 %446
        %448 = vset.pattern.permute.xlu0 1
        %449 = vperm.xlu0 %448, %v393
        %v450 = vpop.permute.xlu0 %449
        %vm451 = vcmp.eq.s32.totalorder %v165, %v396
        %vm452 = vcmp.eq.s32.totalorder %v165, %v399
        %vm453 = vcmp.eq.s32.totalorder %v165, %v402
        %vm454 = vcmp.eq.s32.totalorder %v165, %v405
        %vm455 = vcmp.eq.s32.totalorder %v165, %v408
        %vm456 = vcmp.eq.s32.totalorder %v165, %v411
        %vm457 = vcmp.eq.s32.totalorder %v165, %v414
        %vm458 = vcmp.eq.s32.totalorder %v165, %v417
        %vm459 = vcmp.eq.s32.totalorder %v165, %v420
        %vm460 = vcmp.eq.s32.totalorder %v165, %v423
        %vm461 = vcmp.eq.s32.totalorder %v165, %v426
        %vm462 = vcmp.eq.s32.totalorder %v165, %v429
        %vm463 = vcmp.eq.s32.totalorder %v165, %v432
        %vm464 = vcmp.eq.s32.totalorder %v165, %v435
        %vm465 = vcmp.eq.s32.totalorder %v165, %v438
        %vm466 = vcmp.eq.s32.totalorder %v165, %v441
        %vm467 = vcmp.eq.s32.totalorder %v165, %v444
        %vm468 = vcmp.eq.s32.totalorder %v165, %v447
        %vm469 = vcmp.eq.s32.totalorder %v165, %v450
        %vm470 = vmor %vm299, %vm451
        %vm471 = vmor %vm300, %vm452
        %vm472 = vmor %vm301, %vm453
        %vm473 = vmor %vm302, %vm454
        %vm474 = vmor %vm303, %vm455
        %vm475 = vmor %vm304, %vm456
        %vm476 = vmor %vm305, %vm457
        %vm477 = vmor %vm306, %vm458
        %vm478 = vmor %vm307, %vm459
        %vm479 = vmor %vm308, %vm460
        %vm480 = vmor %vm309, %vm461
        %vm481 = vmor %vm310, %vm462
        %vm482 = vmor %vm311, %vm463
        %vm483 = vmor %vm312, %vm464
        %vm484 = vmor %vm313, %vm465
        %vm485 = vmor %vm314, %vm466
        %vm486 = vmor %vm315, %vm467
        %vm487 = vmor %vm316, %vm468
        %vm488 = vmor %vm317, %vm469
        %vm489 = vcmp.lt.s32.totalorder %v145, 12
        %vm490 = vcmp.lt.s32.totalorder %v146, 12
        %vm491 = vcmp.lt.s32.totalorder %v147, 12
        %vm492 = vcmp.lt.s32.totalorder %v148, 12
        %vm493 = vcmp.lt.s32.totalorder %v149, 12
        %vm494 = vcmp.lt.s32.totalorder %v150, 12
        %vm495 = vcmp.lt.s32.totalorder %v151, 12
        %vm496 = vcmp.lt.s32.totalorder %v152, 12
        %vm497 = vcmp.lt.s32.totalorder %v153, 12
        %vm498 = vcmp.lt.s32.totalorder %v154, 12
        %vm499 = vcmp.lt.s32.totalorder %v155, 12
        %vm500 = vcmp.lt.s32.totalorder %v156, 12
        %vm501 = vcmp.lt.s32.totalorder %v157, 12
        %vm502 = vcmp.lt.s32.totalorder %v158, 12
        %vm503 = vcmp.lt.s32.totalorder %v159, 12
        %vm504 = vcmp.lt.s32.totalorder %v160, 12
        %vm505 = vcmp.lt.s32.totalorder %v161, 12
        %vm506 = vcmp.lt.s32.totalorder %v162, 12
        %vm507 = vcmp.lt.s32.totalorder %v163, 12
        %vm508 = vmand %vm166, %vm489
        %vm509 = vmand %vm167, %vm490
        %vm510 = vmand %vm168, %vm491
        %vm511 = vmand %vm169, %vm492
        %vm512 = vmand %vm170, %vm493
        %vm513 = vmand %vm171, %vm494
        %vm514 = vmand %vm172, %vm495
        %vm515 = vmand %vm173, %vm496
        %vm516 = vmand %vm174, %vm497
        %vm517 = vmand %vm175, %vm498
        %vm518 = vmand %vm176, %vm499
        %vm519 = vmand %vm177, %vm500
        %vm520 = vmand %vm178, %vm501
        %vm521 = vmand %vm179, %vm502
        %vm522 = vmand %vm180, %vm503
        %vm523 = vmand %vm181, %vm504
        %vm524 = vmand %vm182, %vm505
        %vm525 = vmand %vm183, %vm506
        %vm526 = vmand %vm184, %vm507
        %v527 = vadd.s32 %v145, 32
        %v528 = vadd.s32 %v146, 32
        %v529 = vadd.s32 %v147, 32
        %v530 = vadd.s32 %v148, 32
        %v531 = vadd.s32 %v149, 32
        %v532 = vadd.s32 %v150, 32
        %v533 = vadd.s32 %v151, 32
        %v534 = vadd.s32 %v152, 32
        %v535 = vadd.s32 %v153, 32
        %v536 = vadd.s32 %v154, 32
        %v537 = vadd.s32 %v155, 32
        %v538 = vadd.s32 %v156, 32
        %v539 = vadd.s32 %v157, 32
        %v540 = vadd.s32 %v158, 32
        %v541 = vadd.s32 %v159, 32
        %v542 = vadd.s32 %v160, 32
        %v543 = vadd.s32 %v161, 32
        %v544 = vadd.s32 %v162, 32
        %v545 = vadd.s32 %v163, 32
        %v546 = vsel %vm508, %v527, 4294967295
        %v547 = vsel %vm509, %v528, 4294967295
        %v548 = vsel %vm510, %v529, 4294967295
        %v549 = vsel %vm511, %v530, 4294967295
        %v550 = vsel %vm512, %v531, 4294967295
        %v551 = vsel %vm513, %v532, 4294967295
        %v552 = vsel %vm514, %v533, 4294967295
        %v553 = vsel %vm515, %v534, 4294967295
        %v554 = vsel %vm516, %v535, 4294967295
        %v555 = vsel %vm517, %v536, 4294967295
        %v556 = vsel %vm518, %v537, 4294967295
        %v557 = vsel %vm519, %v538, 4294967295
        %v558 = vsel %vm520, %v539, 4294967295
        %v559 = vsel %vm521, %v540, 4294967295
        %v560 = vsel %vm522, %v541, 4294967295
        %v561 = vsel %vm523, %v542, 4294967295
        %v562 = vsel %vm524, %v543, 4294967295
        %v563 = vsel %vm525, %v544, 4294967295
        %v564 = vsel %vm526, %v545, 4294967295
        %565 = vset.pattern.permute.xlu0 2
        %566 = vperm.xlu0 %565, %v546
        %v567 = vpop.permute.xlu0 %566
        %568 = vset.pattern.permute.xlu0 2
        %569 = vperm.xlu0 %568, %v547
        %v570 = vpop.permute.xlu0 %569
        %571 = vset.pattern.permute.xlu0 2
        %572 = vperm.xlu0 %571, %v548
        %v573 = vpop.permute.xlu0 %572
        %574 = vset.pattern.permute.xlu0 2
        %575 = vperm.xlu0 %574, %v549
        %v576 = vpop.permute.xlu0 %575
        %577 = vset.pattern.permute.xlu0 2
        %578 = vperm.xlu0 %577, %v550
        %v579 = vpop.permute.xlu0 %578
        %580 = vset.pattern.permute.xlu0 2
        %581 = vperm.xlu0 %580, %v551
        %v582 = vpop.permute.xlu0 %581
        %583 = vset.pattern.permute.xlu0 2
        %584 = vperm.xlu0 %583, %v552
        %v585 = vpop.permute.xlu0 %584
        %586 = vset.pattern.permute.xlu0 2
        %587 = vperm.xlu0 %586, %v553
        %v588 = vpop.permute.xlu0 %587
        %589 = vset.pattern.permute.xlu0 2
        %590 = vperm.xlu0 %589, %v554
        %v591 = vpop.permute.xlu0 %590
        %592 = vset.pattern.permute.xlu0 2
        %593 = vperm.xlu0 %592, %v555
        %v594 = vpop.permute.xlu0 %593
        %595 = vset.pattern.permute.xlu0 2
        %596 = vperm.xlu0 %595, %v556
        %v597 = vpop.permute.xlu0 %596
        %598 = vset.pattern.permute.xlu0 2
        %599 = vperm.xlu0 %598, %v557
        %v600 = vpop.permute.xlu0 %599
        %601 = vset.pattern.permute.xlu0 2
        %602 = vperm.xlu0 %601, %v558
        %v603 = vpop.permute.xlu0 %602
        %604 = vset.pattern.permute.xlu0 2
        %605 = vperm.xlu0 %604, %v559
        %v606 = vpop.permute.xlu0 %605
        %607 = vset.pattern.permute.xlu0 2
        %608 = vperm.xlu0 %607, %v560
        %v609 = vpop.permute.xlu0 %608
        %610 = vset.pattern.permute.xlu0 2
        %611 = vperm.xlu0 %610, %v561
        %v612 = vpop.permute.xlu0 %611
        %613 = vset.pattern.permute.xlu0 2
        %614 = vperm.xlu0 %613, %v562
        %v615 = vpop.permute.xlu0 %614
        %616 = vset.pattern.permute.xlu0 2
        %617 = vperm.xlu0 %616, %v563
        %v618 = vpop.permute.xlu0 %617
        %619 = vset.pattern.permute.xlu0 2
        %620 = vperm.xlu0 %619, %v564
        %v621 = vpop.permute.xlu0 %620
        %vm622 = vcmp.eq.s32.totalorder %v165, %v567
        %vm623 = vcmp.eq.s32.totalorder %v165, %v570
        %vm624 = vcmp.eq.s32.totalorder %v165, %v573
        %vm625 = vcmp.eq.s32.totalorder %v165, %v576
        %vm626 = vcmp.eq.s32.totalorder %v165, %v579
        %vm627 = vcmp.eq.s32.totalorder %v165, %v582
        %vm628 = vcmp.eq.s32.totalorder %v165, %v585
        %vm629 = vcmp.eq.s32.totalorder %v165, %v588
        %vm630 = vcmp.eq.s32.totalorder %v165, %v591
        %vm631 = vcmp.eq.s32.totalorder %v165, %v594
        %vm632 = vcmp.eq.s32.totalorder %v165, %v597
        %vm633 = vcmp.eq.s32.totalorder %v165, %v600
        %vm634 = vcmp.eq.s32.totalorder %v165, %v603
        %vm635 = vcmp.eq.s32.totalorder %v165, %v606
        %vm636 = vcmp.eq.s32.totalorder %v165, %v609
        %vm637 = vcmp.eq.s32.totalorder %v165, %v612
        %vm638 = vcmp.eq.s32.totalorder %v165, %v615
        %vm639 = vcmp.eq.s32.totalorder %v165, %v618
        %vm640 = vcmp.eq.s32.totalorder %v165, %v621
        %vm641 = vmor %vm470, %vm622
        %vm642 = vmor %vm471, %vm623
        %vm643 = vmor %vm472, %vm624
        %vm644 = vmor %vm473, %vm625
        %vm645 = vmor %vm474, %vm626
        %vm646 = vmor %vm475, %vm627
        %vm647 = vmor %vm476, %vm628
        %vm648 = vmor %vm477, %vm629
        %vm649 = vmor %vm478, %vm630
        %vm650 = vmor %vm479, %vm631
        %vm651 = vmor %vm480, %vm632
        %vm652 = vmor %vm481, %vm633
        %vm653 = vmor %vm482, %vm634
        %vm654 = vmor %vm483, %vm635
        %vm655 = vmor %vm484, %vm636
        %vm656 = vmor %vm485, %vm637
        %vm657 = vmor %vm486, %vm638
        %vm658 = vmor %vm487, %vm639
        %vm659 = vmor %vm488, %vm640
        %v660 = vsel %vm641, 1, 0
        %v661 = vsel %vm642, 1, 0
        %v662 = vsel %vm643, 1, 0
        %v663 = vsel %vm644, 1, 0
        %v664 = vsel %vm645, 1, 0
        %v665 = vsel %vm646, 1, 0
        %v666 = vsel %vm647, 1, 0
        %v667 = vsel %vm648, 1, 0
        %v668 = vsel %vm649, 1, 0
        %v669 = vsel %vm650, 1, 0
        %v670 = vsel %vm651, 1, 0
        %v671 = vsel %vm652, 1, 0
        %v672 = vsel %vm653, 1, 0
        %v673 = vsel %vm654, 1, 0
        %v674 = vsel %vm655, 1, 0
        %v675 = vsel %vm656, 1, 0
        %v676 = vsel %vm657, 1, 0
        %v677 = vsel %vm658, 1, 0
        %v678 = vsel %vm659, 1, 0
        %v679 = vcvt.s32.f32 %v660
        %v680 = vcvt.s32.f32 %v661
        %v681 = vcvt.s32.f32 %v662
        %v682 = vcvt.s32.f32 %v663
        %v683 = vcvt.s32.f32 %v664
        %v684 = vcvt.s32.f32 %v665
        %v685 = vcvt.s32.f32 %v666
        %v686 = vcvt.s32.f32 %v667
        %v687 = vcvt.s32.f32 %v668
        %v688 = vcvt.s32.f32 %v669
        %v689 = vcvt.s32.f32 %v670
        %v690 = vcvt.s32.f32 %v671
        %v691 = vcvt.s32.f32 %v672
        %v692 = vcvt.s32.f32 %v673
        %v693 = vcvt.s32.f32 %v674
        %v694 = vcvt.s32.f32 %v675
        %v695 = vcvt.s32.f32 %v676
        %v696 = vcvt.s32.f32 %v677
        %v697 = vcvt.s32.f32 %v678
        %v698 = vld [vmem:[%s1] sm:$0xff]
        %v699 = vld [vmem:[%s1 + $0x8] sm:$0xff]
        %v700 = vld [vmem:[%s1 + $0x10] sm:$0xff]
        %v701 = vld [vmem:[%s1 + $0x18] sm:$0xff]
        %v702 = vld [vmem:[%s1 + $0x20] sm:$0xff]
        %v703 = vld [vmem:[%s1 + $0x28] sm:$0xff]
        %v704 = vld [vmem:[%s1 + $0x30] sm:$0xff]
        %v705 = vld [vmem:[%s1 + $0x38] sm:$0xff]
        %v706 = vld [vmem:[%s1 + $0x40] sm:$0xff]
        %v707 = vld [vmem:[%s1 + $0x48] sm:$0xff]
        %v708 = vld [vmem:[%s1 + $0x50] sm:$0xff]
        %v709 = vld [vmem:[%s1 + $0x58] sm:$0xff]
        %v710 = vld [vmem:[%s1 + $0x60] sm:$0xff]
        %v711 = vld [vmem:[%s1 + $0x68] sm:$0xff]
        %v712 = vld [vmem:[%s1 + $0x70] sm:$0xff]
        %v713 = vld [vmem:[%s1 + $0x78] sm:$0xff]
        %714 = vmatprep.subr.mxu0 0.0
        %715 = vmatpush1.msra.mxu0 %v698
        %716 = vmatprep.subr.mxu0 0.0
        %717 = vmatpush1.msra.mxu0 %v699
        %718 = vmatprep.subr.mxu0 0.0
        %719 = vmatpush1.msra.mxu0 %v700
        %720 = vmatprep.subr.mxu0 0.0
        %721 = vmatpush1.msra.mxu0 %v701
        %722 = vmatprep.subr.mxu0 0.0
        %723 = vmatpush1.msra.mxu0 %v702
        %724 = vmatprep.subr.mxu0 0.0
        %725 = vmatpush1.msra.mxu0 %v703
        %726 = vmatprep.subr.mxu0 0.0
        %727 = vmatpush1.msra.mxu0 %v704
        %728 = vmatprep.subr.mxu0 0.0
        %729 = vmatpush1.msra.mxu0 %v705
        %730 = vmatprep.subr.mxu0 0.0
        %731 = vmatpush1.msra.mxu0 %v706
        %732 = vmatprep.subr.mxu0 0.0
        %733 = vmatpush1.msra.mxu0 %v707
        %734 = vmatprep.subr.mxu0 0.0
        %735 = vmatpush1.msra.mxu0 %v708
        %736 = vmatprep.subr.mxu0 0.0
        %737 = vmatpush1.msra.mxu0 %v709
        %738 = vmatprep.subr.mxu0 0.0
        %739 = vmatpush1.msra.mxu0 %v710
        %740 = vmatprep.subr.mxu0 0.0
        %741 = vmatpush1.msra.mxu0 %v711
        %742 = vmatprep.subr.mxu0 0.0
        %743 = vmatpush1.msra.mxu0 %v712
        %744 = vmatprep.subr.mxu0 0.0
        %745 = vmatpush1.msra.mxu0 %v713
        %746 = vmatprep.subr.mxu0 0.0
        %747 = vmatpush1.msra.mxu0 0.0
        %748 = vmatprep.subr.mxu0 0.0
        %749 = vmatpush1.msra.mxu0 0.0
        %750 = vmatprep.subr.mxu0 0.0
        %751 = vmatpush1.msra.mxu0 0.0
        %752 = vmatprep.subr.mxu0 0.0
        %753 = vmatpush1.msra.mxu0 0.0
        %754 = vmatprep.subr.mxu0 0.0
        %755 = vmatpush1.msra.mxu0 0.0
        %756 = vmatprep.subr.mxu0 0.0
        %757 = vmatpush1.msra.mxu0 0.0
        %758 = vmatprep.subr.mxu0 0.0
        %759 = vmatpush1.msra.mxu0 0.0
        %760 = vmatprep.subr.mxu0 0.0
        %761 = vmatpush1.msra.mxu0 0.0
        %762 = vmatprep.subr.mxu0 0.0
        %763 = vmatpush1.msra.mxu0 0.0
        %764 = vmatprep.subr.mxu0 0.0
        %765 = vmatpush1.msra.mxu0 0.0
        %766 = vmatprep.subr.mxu0 0.0
        %767 = vmatpush1.msra.mxu0 0.0
        %768 = vmatprep.subr.mxu0 0.0
        %769 = vmatpush1.msra.mxu0 0.0
        %770 = vmatprep.subr.mxu0 0.0
        %771 = vmatpush1.msra.mxu0 0.0
        %772 = vmatprep.subr.mxu0 0.0
        %773 = vmatpush1.msra.mxu0 0.0
        %774 = vmatprep.subr.mxu0 0.0
        %775 = vmatpush1.msra.mxu0 0.0
        %776 = vmatprep.subr.mxu0 0.0
        %777 = vmatpush1.msra.mxu0 0.0
        %778 = vmatprep.mubr.f32.mxu0 0.0
        %779 = vmatmul.mubr.f32.gmra.mrb[0].mxu0 %v679
        %v780 = vpop.f32.mrb[0].mxu0
        %v781 = vadd.f32 0.0, %v780
        %v782 = vpop.f32.mrb[0].mxu0
        %783 = vmatprep.mubr.f32.mxu0 0.0
        %784 = vmatmul.mubr.f32.gmra.mrb[0].mxu0 %v680
        %v785 = vpop.f32.mrb[0].mxu0
        %v786 = vadd.f32 0.0, %v785
        %v787 = vpop.f32.mrb[0].mxu0
        %788 = vmatprep.mubr.f32.mxu0 0.0
        %789 = vmatmul.mubr.f32.gmra.mrb[0].mxu0 %v681
        %v790 = vpop.f32.mrb[0].mxu0
        %v791 = vadd.f32 0.0, %v790
        %v792 = vpop.f32.mrb[0].mxu0
        %793 = vmatprep.mubr.f32.mxu0 0.0
        %794 = vmatmul.mubr.f32.gmra.mrb[0].mxu0 %v682
        %v795 = vpop.f32.mrb[0].mxu0
        %v796 = vadd.f32 0.0, %v795
        %v797 = vpop.f32.mrb[0].mxu0
        %798 = vmatprep.mubr.f32.mxu0 0.0
        %799 = vmatmul.mubr.f32.gmra.mrb[0].mxu0 %v683
        %v800 = vpop.f32.mrb[0].mxu0
        %v801 = vadd.f32 0.0, %v800
        %v802 = vpop.f32.mrb[0].mxu0
        %803 = vmatprep.mubr.f32.mxu0 0.0
        %804 = vmatmul.mubr.f32.gmra.mrb[0].mxu0 %v684
        %v805 = vpop.f32.mrb[0].mxu0
        %v806 = vadd.f32 0.0, %v805
        %v807 = vpop.f32.mrb[0].mxu0
        %808 = vmatprep.mubr.f32.mxu0 0.0
        %809 = vmatmul.mubr.f32.gmra.mrb[0].mxu0 %v685
        %v810 = vpop.f32.mrb[0].mxu0
        %v811 = vadd.f32 0.0, %v810
        %v812 = vpop.f32.mrb[0].mxu0
        %813 = vmatprep.mubr.f32.mxu0 0.0
        %814 = vmatmul.mubr.f32.gmra.mrb[0].mxu0 %v686
        %v815 = vpop.f32.mrb[0].mxu0
        %v816 = vadd.f32 0.0, %v815
        %v817 = vpop.f32.mrb[0].mxu0
        %818 = vmatprep.mubr.f32.mxu0 0.0
        %819 = vmatmul.mubr.f32.gmra.mrb[0].mxu0 %v687
        %v820 = vpop.f32.mrb[0].mxu0
        %v821 = vadd.f32 0.0, %v820
        %v822 = vpop.f32.mrb[0].mxu0
        %823 = vmatprep.mubr.f32.mxu0 0.0
        %824 = vmatmul.mubr.f32.gmra.mrb[0].mxu0 %v688
        %v825 = vpop.f32.mrb[0].mxu0
        %v826 = vadd.f32 0.0, %v825
        %v827 = vpop.f32.mrb[0].mxu0
        %828 = vmatprep.mubr.f32.mxu0 0.0
        %829 = vmatmul.mubr.f32.gmra.mrb[0].mxu0 %v689
        %v830 = vpop.f32.mrb[0].mxu0
        %v831 = vadd.f32 0.0, %v830
        %v832 = vpop.f32.mrb[0].mxu0
        %833 = vmatprep.mubr.f32.mxu0 0.0
        %834 = vmatmul.mubr.f32.gmra.mrb[0].mxu0 %v690
        %v835 = vpop.f32.mrb[0].mxu0
        %v836 = vadd.f32 0.0, %v835
        %v837 = vpop.f32.mrb[0].mxu0
        %838 = vmatprep.mubr.f32.mxu0 0.0
        %839 = vmatmul.mubr.f32.gmra.mrb[0].mxu0 %v691
        %v840 = vpop.f32.mrb[0].mxu0
        %v841 = vadd.f32 0.0, %v840
        %v842 = vpop.f32.mrb[0].mxu0
        %843 = vmatprep.mubr.f32.mxu0 0.0
        %844 = vmatmul.mubr.f32.gmra.mrb[0].mxu0 %v692
        %v845 = vpop.f32.mrb[0].mxu0
        %v846 = vadd.f32 0.0, %v845
        %v847 = vpop.f32.mrb[0].mxu0
        %848 = vmatprep.mubr.f32.mxu0 0.0
        %849 = vmatmul.mubr.f32.gmra.mrb[0].mxu0 %v693
        %v850 = vpop.f32.mrb[0].mxu0
        %v851 = vadd.f32 0.0, %v850
        %v852 = vpop.f32.mrb[0].mxu0
        %853 = vmatprep.mubr.f32.mxu0 0.0
        %854 = vmatmul.mubr.f32.gmra.mrb[0].mxu0 %v694
        %v855 = vpop.f32.mrb[0].mxu0
        %v856 = vadd.f32 0.0, %v855
        %v857 = vpop.f32.mrb[0].mxu0
        %858 = vmatprep.mubr.f32.mxu0 0.0
        %859 = vmatmul.mubr.f32.gmra.mrb[0].mxu0 %v695
        %v860 = vpop.f32.mrb[0].mxu0
        %v861 = vadd.f32 0.0, %v860
        %v862 = vpop.f32.mrb[0].mxu0
        %863 = vmatprep.mubr.f32.mxu0 0.0
        %864 = vmatmul.mubr.f32.gmra.mrb[0].mxu0 %v696
        %v865 = vpop.f32.mrb[0].mxu0
        %v866 = vadd.f32 0.0, %v865
        %v867 = vpop.f32.mrb[0].mxu0
        %868 = vmatprep.mubr.f32.mxu0 0.0
        %869 = vmatmul.mubr.f32.gmra.mrb[0].mxu0 %v697
        %v870 = vpop.f32.mrb[0].mxu0
        %v871 = vadd.f32 0.0, %v870
        %v872 = vpop.f32.mrb[0].mxu0
        %873 = vdwg.mxu0
        %874 = vst [vmem:[%s137] sm:$0xff] %v781
        %875 = vst [vmem:[%s137 + $0x8] sm:$0xff] %v786
        %876 = vst [vmem:[%s137 + $0x10] sm:$0xff] %v791
        %877 = vst [vmem:[%s137 + $0x18] sm:$0xff] %v796
        %878 = vst [vmem:[%s137 + $0x20] sm:$0xff] %v801
        %879 = vst [vmem:[%s137 + $0x28] sm:$0xff] %v806
        %880 = vst [vmem:[%s137 + $0x30] sm:$0xff] %v811
        %881 = vst [vmem:[%s137 + $0x38] sm:$0xff] %v816
        %882 = vst [vmem:[%s137 + $0x40] sm:$0xff] %v821
        %883 = vst [vmem:[%s137 + $0x48] sm:$0xff] %v826
        %884 = vst [vmem:[%s137 + $0x50] sm:$0xff] %v831
        %885 = vst [vmem:[%s137 + $0x58] sm:$0xff] %v836
        %886 = vst [vmem:[%s137 + $0x60] sm:$0xff] %v841
        %887 = vst [vmem:[%s137 + $0x68] sm:$0xff] %v846
        %888 = vst [vmem:[%s137 + $0x70] sm:$0xff] %v851
        %889 = vst [vmem:[%s137 + $0x78] sm:$0xff] %v856
        %890 = vst [vmem:[%s137 + $0x80] sm:$0xff] %v861
        %891 = vst [vmem:[%s137 + $0x88] sm:$0xff] %v866
        %892 = vst [vmem:[%s137 + $0x90] sm:$0xff] %v871
        %s893 = sand.u32 %s71, 1
        %s894 = scalar_lea.sflag [#allocation3], %s893
        %s895 = sand.u32 %s71, 1
        %s896 = smul.addr %s895, 152
        %s897 = scalar_lea.vmem [#allocation2], %s896
        // Predicated region
        $region29: #{tpu_custom_call.1} parent=27 // pred_check
          %p898 = pneg %p81
        $region30: #{tpu_custom_call.1} parent=27 // pred_check_branch
          %900 = sbr.rel (%p898) target = $region32
        $region31: #{tpu_custom_call.1} parent=27 // pred_region
          %s901 = smul.u32 19, %s16
          %s903 = ssub.s32 2432, 2432
          %904 = vsyncadd %s894, %s903
          %s905 = smul.addr %s901, 128
          %s906 = scalar_lea.hbm %s2, %s905
          %s907 = sshll.u32 %s897, 4
          %s908 = int_to_ptr.vmem [resolvable:$true] %s907
          %913 = dma.vmem_to_hbm [thread:$0]  %s908, 2432, %s906, %s894, 128, 128, 8
        $region32: #{tpu_custom_call.1} parent=27 // pred_fallthru
          _
      $region28: #{tpu_custom_call.1} parent=5 // pred_fallthru
        _
      %p914 = scmp.le.s32.totalorder 2, %s11
      // Predicated region
      $region33: #{tpu_custom_call.1} parent=5 // pred_check
        %p915 = pneg %p914
      $region34: #{tpu_custom_call.1} parent=5 // pred_check_branch
        %917 = sbr.rel (%p915) target = $region36
      $region35: #{tpu_custom_call.1} parent=5 // pred_region
        %s918 = ssub.s32 %s11, 2
        // Predicated region
        $region37: #{tpu_custom_call.1} parent=35 // pred_check
          %p919 = pneg %p87
        $region38: #{tpu_custom_call.1} parent=35 // pred_check_branch
          %921 = sbr.rel (%p919) target = $region40
        $region39: #{tpu_custom_call.1} parent=35 // pred_region
          %s922 = sand.u32 %s72, 1
          %s923 = scalar_lea.sflag [#allocation3], %s922
          %s924 = sand.u32 %s72, 1
          %s925 = smul.addr %s924, 152
          %s926 = scalar_lea.vmem [#allocation2], %s925
          %927 = dma.done %s923, 2432
        $region40: #{tpu_custom_call.1} parent=35 // pred_fallthru
          _
      $region36: #{tpu_custom_call.1} parent=5 // pred_fallthru
        _
    $region6: #{tpu_custom_call.1} parent=1 // loop_footer
      %s15 = sadd.s32 1, %s11
    $region7: #{tpu_custom_call.1} parent=1 // loop_footer_branch
      %10 = sbr.rel target = $region3
    $region8: #{tpu_custom_call.1} parent=1 // loop_exit
      _
    %928 = vsyncpa [#allocation3], 1
    %s929 = scalar_lea.sflag [#allocation3], 1
    %930 = vsyncpa %s929, 1

</llo_original>
